<compile_context>
chip_gen: v7x
topology: tpu7x:2x2x1
jax: 0.10.0
libtpu: 0.0.40
codegen_flags: <defaults>
</compile_context>

<pallas_src>
import math

import jax
import jax.numpy as jnp
from jax.experimental import pallas as pl
from jax.experimental.pallas import tpu as pltpu


def _make_concat_head_kernel(num_feats):
    def kernel(*refs):
        x_refs = refs[:num_feats]                       # each (1, C_i, TN)
        w1_refs = refs[num_feats:2 * num_feats]         # each (C, C_i), BN-scaled
        t1_ref, w2_ref, t2_ref, o_ref = refs[2 * num_feats:]

        # layer 1: fused concat + 1x1 conv (BN scale folded into W1 rows)
        h = jnp.dot(w1_refs[0][...], x_refs[0][0],
                    preferred_element_type=jnp.float32)             # (C, TN) f32
        for i in range(1, num_feats):
            h = h + jnp.dot(w1_refs[i][...], x_refs[i][0],
                            preferred_element_type=jnp.float32)
        h = jnp.maximum(h + t1_ref[...], 0.0)                       # f32 epilogue

        # layer 2: 1x1 conv (C -> 2), BN scale folded into W2 rows, shift + ReLU
        y = jnp.dot(w2_ref[...], h.astype(w2_ref.dtype),
                    preferred_element_type=jnp.float32)             # (2, TN) f32
        y = jnp.maximum(y + t2_ref[...], 0.0)

        o_ref[0] = y.astype(o_ref.dtype)
    return kernel


def concat_head_forward(concat_feats, params, *,
                        compute_dtype=jnp.bfloat16, tn_max=2048):
    """concat_feats: list/tuple of (B, C_i, N) arrays or a single (B, C, N) array.

    Returns ins_logit of shape (B, 2, N) (NCW), matching the PyTorch module.
    """
    if not isinstance(concat_feats, (list, tuple)):
        concat_feats = (concat_feats,)
    feats = [jnp.asarray(f) for f in concat_feats]
    num_feats = len(feats)
    B, _, N = feats[0].shape
    channels = [int(f.shape[1]) for f in feats]
    C = sum(channels)

    # ---- fold BN (eval running stats) + conv bias into weights / shifts ----
    eps = 1e-5
    s1 = params["gamma1"] / jnp.sqrt(params["var1"] + eps)              # (C,)
    t1 = params["beta1"] + (params["b1"] - params["mean1"]) * s1        # (C,)
    s2 = params["gamma2"] / jnp.sqrt(params["var2"] + eps)              # (2,)
    t2 = params["beta2"] + (params["b2"] - params["mean2"]) * s2        # (2,)

    w1s = (params["w1"] * s1[:, None]).astype(compute_dtype)            # (C, C)
    w2s = (params["w2"] * s2[:, None]).astype(compute_dtype)            # (2, C)
    t1c = t1.reshape(C, 1).astype(jnp.float32)
    t2c = t2.reshape(2, 1).astype(jnp.float32)

    # split W1 columns to match the (never materialized) channel concat
    w1_slices = []
    off = 0
    for ci in channels:
        w1_slices.append(w1s[:, off:off + ci])
        off += ci

    # ---- choose the N tile: multiple of 128, bounded for VMEM double-buffering ----
    n128 = pl.cdiv(N, 128) * 128
    tn = min(tn_max, n128)
    n_pad = pl.cdiv(N, tn) * tn
    grid_n = n_pad // tn

    feats = [f.astype(compute_dtype) for f in feats]
    if n_pad != N:
        feats = [jnp.pad(f, ((0, 0), (0, 0), (0, n_pad - N))) for f in feats]

    in_specs = (
        [pl.BlockSpec((1, ci, tn), lambda b, n: (b, 0, n)) for ci in channels]
        + [pl.BlockSpec((C, ci), lambda b, n: (0, 0)) for ci in channels]
        + [pl.BlockSpec((C, 1), lambda b, n: (0, 0)),
           pl.BlockSpec((2, C), lambda b, n: (0, 0)),
           pl.BlockSpec((2, 1), lambda b, n: (0, 0))]
    )

    itemsize = jnp.dtype(compute_dtype).itemsize
    cost = pl.CostEstimate(
        flops=int(2 * B * N * C * (C + 2)),
        transcendentals=0,
        bytes_accessed=int(B * N * C * itemsize          # activations in
                           + B * N * 2 * 4               # logits out
                           + (C * C + 2 * C) * itemsize  # weights
                           + (C + 2) * 4),               # shifts
    )

    out = pl.pallas_call(
        _make_concat_head_kernel(num_feats),
        out_shape=jax.ShapeDtypeStruct((B, 2, n_pad), jnp.float32),
        grid_spec=pltpu.PrefetchScalarGridSpec(
            num_scalar_prefetch=0,
            grid=(B, grid_n),
            in_specs=in_specs,
            out_specs=pl.BlockSpec((1, 2, tn), lambda b, n: (b, 0, n)),
        ),
        compiler_params=pltpu.CompilerParams(
            dimension_semantics=("parallel", "parallel")),
        cost_estimate=cost,
    )(*feats, *w1_slices, t1c, w2s, t2c)

    if n_pad != N:
        out = out[:, :, :N]
    return out


def _xavier_uniform(key, out_ch, in_ch):
    bound = math.sqrt(6.0 / (in_ch + out_ch))
    return jax.random.uniform(key, (out_ch, in_ch), jnp.float32, -bound, bound)


def init_params(key, in_channels):
    k1, k2 = jax.random.split(key)
    C = in_channels
    return {
        # Conv1d weights are (out, in, 1) in PyTorch; kernel dim squeezed.
        "w1": _xavier_uniform(k1, C, C),
        "b1": jnp.zeros((C,), jnp.float32),
        "gamma1": jnp.ones((C,), jnp.float32),
        "beta1": jnp.zeros((C,), jnp.float32),
        "mean1": jnp.zeros((C,), jnp.float32),
        "var1": jnp.ones((C,), jnp.float32),
        "w2": _xavier_uniform(k2, 2, C),
        "b2": jnp.zeros((2,), jnp.float32),
        "gamma2": jnp.ones((2,), jnp.float32),
        "beta2": jnp.zeros((2,), jnp.float32),
        "mean2": jnp.zeros((2,), jnp.float32),
        "var2": jnp.ones((2,), jnp.float32),
    }


def _reference_forward(concat_feats, params):
    """Pure-JAX reference (eval-mode PyTorch semantics)."""
    if not isinstance(concat_feats, (list, tuple)):
        concat_feats = (concat_feats,)
    x = jnp.concatenate([f.astype(jnp.float32) for f in concat_feats], axis=1)
    eps = 1e-5

    def layer(x, w, b, gamma, beta, mean, var):
        y = jnp.einsum("oc,bcn->bon", w, x,
                       precision=jax.lax.Precision.HIGHEST) + b[None, :, None]
        y = gamma[None, :, None] * (y - mean[None, :, None]) / jnp.sqrt(
            var[None, :, None] + eps) + beta[None, :, None]
        # TODO(synk): confirm SharedMLP really applies ReLU on the final layer;
        #             kept to match the original module's behavior.
        return jnp.maximum(y, 0.0)

    h = layer(x, params["w1"], params["b1"], params["gamma1"], params["beta1"],
              params["mean1"], params["var1"])
    y = layer(h, params["w2"], params["b2"], params["gamma2"], params["beta2"],
              params["mean2"], params["var2"])
    return y


if __name__ == "__main__":
    B, N = 2, 256
    in_channels = 32  # total channels after concatenation

    key = jax.random.PRNGKey(0)
    k_params, k_f1, k_f2 = jax.random.split(key, 3)
    params = init_params(k_params, in_channels)

    # Two feature maps concatenated along the channel axis (dim=1).
    feat_a = jax.random.normal(k_f1, (B, in_channels // 2, N), jnp.float32)
    feat_b = jax.random.normal(k_f2, (B, in_channels // 2, N), jnp.float32)
    concat_feats = [feat_a, feat_b]

    ref = _reference_forward(concat_feats, params)

    # 1) f32 matmul path: tight numerical check.
    out_f32 = jax.block_until_ready(
        concat_head_forward(concat_feats, params, compute_dtype=jnp.float32))
    assert out_f32.shape == (B, 2, N), out_f32.shape
    assert jnp.allclose(out_f32, ref, atol=5e-4, rtol=5e-4), (
        float(jnp.max(jnp.abs(out_f32 - ref))))

    # 2) fast path: bf16 MXU operands, f32 accumulation + f32 epilogue.
    out_bf16 = jax.block_until_ready(
        concat_head_forward(concat_feats, params, compute_dtype=jnp.bfloat16))
    assert out_bf16.shape == (B, 2, N), out_bf16.shape
    assert jnp.allclose(out_bf16, ref, atol=1e-1, rtol=5e-2), (
        float(jnp.max(jnp.abs(out_bf16 - ref))))

    # 3) unaligned N exercises the tail padding / output slicing path.
    N2 = 200
    feats2 = [feat_a[:, :, :N2], feat_b[:, :, :N2]]
    ref2 = _reference_forward(feats2, params)
    out2 = jax.block_until_ready(
        concat_head_forward(feats2, params, compute_dtype=jnp.float32))
    assert out2.shape == (B, 2, N2), out2.shape
    assert jnp.allclose(out2, ref2, atol=5e-4, rtol=5e-4), (
        float(jnp.max(jnp.abs(out2 - ref2))))

    print("KERNEL_OK")
</pallas_src>

<mosaic_0001>
module attributes {stable_mosaic.version = 11 : i64} {
  func.func @kernel(%arg0: i32, %arg1: i32, %arg2: memref<1x16x256xf32, #tpu.memory_space<vmem>>, %arg3: memref<1x16x256xf32, #tpu.memory_space<vmem>>, %arg4: memref<32x16xf32, #tpu.memory_space<vmem>>, %arg5: memref<32x16xf32, #tpu.memory_space<vmem>>, %arg6: memref<32x1xf32, #tpu.memory_space<vmem>>, %arg7: memref<2x32xf32, #tpu.memory_space<vmem>>, %arg8: memref<2x1xf32, #tpu.memory_space<vmem>>, %arg9: memref<1x2x256xf32, #tpu.memory_space<vmem>>) attributes {dimension_semantics = [#tpu.dimension_semantics<parallel>, #tpu.dimension_semantics<parallel>], iteration_bounds = array<i64: 2, 1>, scalar_prefetch = 0 : i64, scratch_operands = 0 : i64, tpu.core_type = #tpu.core_type<tc>, window_params = [{transform_indices = @transform_0, window_bounds = array<i64: 1, 16, 256>}, {transform_indices = @transform_1, window_bounds = array<i64: 1, 16, 256>}, {pipeline_mode = #tpu.pipeline_mode<synchronous>, transform_indices = @transform_2, window_bounds = array<i64: 32, 16>}, {pipeline_mode = #tpu.pipeline_mode<synchronous>, transform_indices = @transform_3, window_bounds = array<i64: 32, 16>}, {pipeline_mode = #tpu.pipeline_mode<synchronous>, transform_indices = @transform_4, window_bounds = array<i64: 32, 1>}, {pipeline_mode = #tpu.pipeline_mode<synchronous>, transform_indices = @transform_5, window_bounds = array<i64: 2, 32>}, {pipeline_mode = #tpu.pipeline_mode<synchronous>, transform_indices = @transform_6, window_bounds = array<i64: 2, 1>}, {transform_indices = @transform_7, window_bounds = array<i64: 1, 2, 256>}]} {
    %c0 = arith.constant 0 : index
    %c0_0 = arith.constant 0 : index
    %0 = vector.load %arg4[%c0, %c0_0] : memref<32x16xf32, #tpu.memory_space<vmem>>, vector<32x16xf32>
    %c0_1 = arith.constant 0 : index
    %c0_2 = arith.constant 0 : index
    %c0_3 = arith.constant 0 : index
    %1 = vector.load %arg2[%c0_1, %c0_2, %c0_3] : memref<1x16x256xf32, #tpu.memory_space<vmem>>, vector<1x16x256xf32>
    %2 = vector.shape_cast %1 : vector<1x16x256xf32> to vector<16x256xf32>
    %cst = arith.constant dense<0.000000e+00> : vector<32x256xf32>
    %3 = tpu.matmul %0, %2, %cst {dimension_numbers = #tpu.dot_dimension_numbers<[1], [0], [0], [1], [0, 0, 1, 1], [], []>} : vector<32x16xf32>, vector<16x256xf32>, vector<32x256xf32> -> vector<32x256xf32>
    %c0_4 = arith.constant 0 : index
    %c0_5 = arith.constant 0 : index
    %4 = vector.load %arg5[%c0_4, %c0_5] : memref<32x16xf32, #tpu.memory_space<vmem>>, vector<32x16xf32>
    %c0_6 = arith.constant 0 : index
    %c0_7 = arith.constant 0 : index
    %c0_8 = arith.constant 0 : index
    %5 = vector.load %arg3[%c0_6, %c0_7, %c0_8] : memref<1x16x256xf32, #tpu.memory_space<vmem>>, vector<1x16x256xf32>
    %6 = vector.shape_cast %5 : vector<1x16x256xf32> to vector<16x256xf32>
    %cst_9 = arith.constant dense<0.000000e+00> : vector<32x256xf32>
    %7 = tpu.matmul %4, %6, %cst_9 {dimension_numbers = #tpu.dot_dimension_numbers<[1], [0], [0], [1], [0, 0, 1, 1], [], []>} : vector<32x16xf32>, vector<16x256xf32>, vector<32x256xf32> -> vector<32x256xf32>
    %8 = arith.addf %3, %7 : vector<32x256xf32>
    %c0_10 = arith.constant 0 : index
    %c0_11 = arith.constant 0 : index
    %9 = vector.load %arg6[%c0_10, %c0_11] : memref<32x1xf32, #tpu.memory_space<vmem>>, vector<32x1xf32>
    %10 = vector.broadcast %9 : vector<32x1xf32> to vector<32x256xf32>
    %11 = arith.addf %8, %10 : vector<32x256xf32>
    %cst_12 = arith.constant 0.000000e+00 : f32
    %12 = vector.broadcast %cst_12 : f32 to vector<32x256xf32>
    %13 = arith.maximumf %11, %12 : vector<32x256xf32>
    %c0_13 = arith.constant 0 : index
    %c0_14 = arith.constant 0 : index
    %14 = vector.load %arg7[%c0_13, %c0_14] : memref<2x32xf32, #tpu.memory_space<vmem>>, vector<2x32xf32>
    %cst_15 = arith.constant dense<0.000000e+00> : vector<2x256xf32>
    %15 = tpu.matmul %14, %13, %cst_15 {dimension_numbers = #tpu.dot_dimension_numbers<[1], [0], [0], [1], [0, 0, 1, 1], [], []>} : vector<2x32xf32>, vector<32x256xf32>, vector<2x256xf32> -> vector<2x256xf32>
    %c0_16 = arith.constant 0 : index
    %c0_17 = arith.constant 0 : index
    %16 = vector.load %arg8[%c0_16, %c0_17] : memref<2x1xf32, #tpu.memory_space<vmem>>, vector<2x1xf32>
    %17 = vector.broadcast %16 : vector<2x1xf32> to vector<2x256xf32>
    %18 = arith.addf %15, %17 : vector<2x256xf32>
    %cst_18 = arith.constant 0.000000e+00 : f32
    %19 = vector.broadcast %cst_18 : f32 to vector<2x256xf32>
    %20 = arith.maximumf %18, %19 : vector<2x256xf32>
    %c0_19 = arith.constant 0 : index
    %c0_20 = arith.constant 0 : index
    %c0_21 = arith.constant 0 : index
    %21 = vector.load %arg9[%c0_19, %c0_20, %c0_21] : memref<1x2x256xf32, #tpu.memory_space<vmem>>, vector<1x2x256xf32>
    %22 = vector.shape_cast %21 : vector<1x2x256xf32> to vector<2x256xf32>
    %23 = vector.shape_cast %20 : vector<2x256xf32> to vector<1x2x256xf32>
    tpu.vector_store %arg9[%c0_19, %c0_20, %c0_21], %23 {strides = array<i32>} : memref<1x2x256xf32, #tpu.memory_space<vmem>>, vector<1x2x256xf32>,
    return
  }
  func.func @transform_0(%arg0: i32, %arg1: i32) -> (i32, i32, i32) {
    %c0_i32 = arith.constant 0 : i32
    %c0_i32_0 = arith.constant 0 : i32
    return %arg0, %c0_i32, %arg1 : i32, i32, i32
  }
  func.func @transform_1(%arg0: i32, %arg1: i32) -> (i32, i32, i32) {
    %c0_i32 = arith.constant 0 : i32
    %c0_i32_0 = arith.constant 0 : i32
    return %arg0, %c0_i32, %arg1 : i32, i32, i32
  }
  func.func @transform_2(%arg0: i32, %arg1: i32) -> (i32, i32) {
    %c0_i32 = arith.constant 0 : i32
    %c0_i32_0 = arith.constant 0 : i32
    %c0_i32_1 = arith.constant 0 : i32
    return %c0_i32, %c0_i32_0 : i32, i32
  }
  func.func @transform_3(%arg0: i32, %arg1: i32) -> (i32, i32) {
    %c0_i32 = arith.constant 0 : i32
    %c0_i32_0 = arith.constant 0 : i32
    %c0_i32_1 = arith.constant 0 : i32
    return %c0_i32, %c0_i32_0 : i32, i32
  }
  func.func @transform_4(%arg0: i32, %arg1: i32) -> (i32, i32) {
    %c0_i32 = arith.constant 0 : i32
    %c0_i32_0 = arith.constant 0 : i32
    %c0_i32_1 = arith.constant 0 : i32
    return %c0_i32, %c0_i32_0 : i32, i32
  }
  func.func @transform_5(%arg0: i32, %arg1: i32) -> (i32, i32) {
    %c0_i32 = arith.constant 0 : i32
    %c0_i32_0 = arith.constant 0 : i32
    %c0_i32_1 = arith.constant 0 : i32
    return %c0_i32, %c0_i32_0 : i32, i32
  }
  func.func @transform_6(%arg0: i32, %arg1: i32) -> (i32, i32) {
    %c0_i32 = arith.constant 0 : i32
    %c0_i32_0 = arith.constant 0 : i32
    %c0_i32_1 = arith.constant 0 : i32
    return %c0_i32, %c0_i32_0 : i32, i32
  }
  func.func @transform_7(%arg0: i32, %arg1: i32) -> (i32, i32, i32) {
    %c0_i32 = arith.constant 0 : i32
    %c0_i32_0 = arith.constant 0 : i32
    return %arg0, %c0_i32, %arg1 : i32, i32, i32
  }
}

</mosaic_0001>

<llo_original>
// kernel: tpu_custom_call.1
$region0: #{tpu_custom_call.1}
  #allocation0 [shape = 'u32[]', space=smem, size = 0x4, offset = 0x4, fixed_abs, tag = 'smem constant byte address 0x4 - core index']
  #allocation1 [shape = 'u32[144,128]{1,0:T(1,128)}', space=vmem, size = 0x12000, scoped, tag = 'internal scratch']
  %s0 = inlined_call_operand.vmem [shape: f32[2,16,256], index: 0, kind: input, shape index: {}]
  %s1 = inlined_call_operand.vmem [shape: f32[2,16,256], index: 1, kind: input, shape index: {}]
  %s2 = inlined_call_operand.vmem [shape: f32[32,16], index: 2, kind: input, shape index: {}]
  %s3 = inlined_call_operand.vmem [shape: f32[32,16], index: 3, kind: input, shape index: {}]
  %s4 = inlined_call_operand.vmem [shape: f32[32,1], index: 4, kind: input, shape index: {}]
  %s5 = inlined_call_operand.vmem [shape: f32[2,32], index: 5, kind: input, shape index: {}]
  %s6 = inlined_call_operand.vmem [shape: f32[2,1], index: 6, kind: input, shape index: {}]
  %s7 = inlined_call_operand.hbm [shape: f32[2,2,256], index: 7, kind: output, shape index: {}]
  %s8 = sld [smem:[#allocation0]]
  $region61: #{tpu_custom_call.1} parent=0
    _
  %s10 = ssub.s32 1, %s8
  %s11 = scalar_select 0, %s10, %s8
  $region1: #{tpu_custom_call.1} parent=0
    #allocation2 [shape = 'u8[4096]{0}', space=vmem, size = 0x1000, scoped, tag = 'output window, operand 0']
    #allocation3 [shape = 's32[2]{0}', space=sflag, size = 0x8, scoped, tag = 'scoped memory for tpu_custom_call.1']
    %12 = vsyncpa [#allocation3], 0
    %s13 = scalar_lea.sflag [#allocation3], 1
    %14 = vsyncpa %s13, 0
    loop: start=0, step=1, limit=4
    $region2: #{tpu_custom_call.1} parent=1 // loop_pre_header
      _
    $region3: #{tpu_custom_call.1} parent=1 // loop_header
      %s16 = sphi 0, %s20
      %p17 = scmp.ge.s32.totalorder %s16, 4
      %s23 = sphi 0, %s35
      %s24 = sphi 0, %s31
      %s25 = sphi 0, %s23
      %s26 = sphi 0, %s24
      %s27 = sphi 0, %s25
      %s28 = sphi 0, %s26
      %s40 = sphi 0, %s42
      %s43 = sphi 0, %s40
      %s44 = sphi 0, %s43
      %s60 = sphi 0, %s44
      %s68 = sphi 0, %s70
      %s71 = sphi 0, %s68
      %s72 = sphi 0, %s71
      %s88 = sphi 0, %s72
      %s92 = sphi 0, %s92
      %s94 = sphi 0, %s92
      %s95 = sphi 0, %s94
      %s109 = sphi 0, %s95
      %s113 = sphi 0, %s113
      %s115 = sphi 0, %s113
      %s116 = sphi 0, %s115
      %s130 = sphi 0, %s116
      %s134 = sphi 0, %s134
      %s136 = sphi 0, %s134
      %s137 = sphi 0, %s136
      %s151 = sphi 0, %s137
      %s155 = sphi 0, %s155
      %s157 = sphi 0, %s155
      %s158 = sphi 0, %s157
      %s172 = sphi 0, %s158
      %s176 = sphi 0, %s176
      %s178 = sphi 0, %s176
      %s179 = sphi 0, %s178
      %s193 = sphi 0, %s179
      %s201 = sphi 0, %s203
      %s204 = sphi 0, %s201
      %s205 = sphi 0, %s204
      %s221 = sphi 0, %s205
    $region4: #{tpu_custom_call.1} parent=1 // loop_header_branch
      %19 = sbr.rel (%p17) target = $region8
    $region5: #{tpu_custom_call.1} parent=1 // loop_body
      %s21 = ssub.s32 %s16, 1
      %s22 = ssub.s32 %s16, 2
      %s29 = sadd.s32 1, %s24
      %p30 = scmp.ge.s32.totalorder %s29, 1
      %s31 = scalar_select %p30, 0, %s29
      %s32 = sadd.s32 1, %s23
      %s33 = scalar_select %p30, %s32, %s23
      %p34 = scmp.ge.s32.totalorder %s33, 2
      %s35 = scalar_select %p34, 0, %s33
      %s36 = ssub.s32 %s23, %s35
      %s37 = ssub.s32 %s24, %s31
      %s38 = sor.u32 %s36, %s37
      %p39 = scmp.eq.s32.totalorder %s38, 0
      %s41 = sadd.s32 %s40, 1
      %s42 = scalar_select %p39, %s40, %s41
      %p45 = pneg %p39
      %p46 = scmp.eq.s32.totalorder %s16, 1
      %p47 = por %p45, %p46
      %p48 = scmp.ne.s32.totalorder %s40, %s43
      %p49 = scmp.eq.s32.totalorder %s16, 0
      %p50 = por %p48, %p49
      %p51 = scmp.ne.s32.totalorder %s40, %s43
      %p52 = scmp.eq.s32.totalorder %s21, 1
      %p53 = por %p51, %p52
      %p54 = scmp.ne.s32.totalorder %s43, %s44
      %p55 = scmp.eq.s32.totalorder %s21, 0
      %p56 = por %p54, %p55
      %p57 = scmp.ne.s32.totalorder %s43, %s44
      %p58 = scmp.eq.s32.totalorder %s22, 1
      %p59 = por %p57, %p58
      %p61 = scmp.ne.s32.totalorder %s44, %s60
      %p62 = scmp.eq.s32.totalorder %s22, 0
      %p63 = por %p61, %p62
      %s64 = ssub.s32 %s23, %s35
      %s65 = ssub.s32 %s24, %s31
      %s66 = sor.u32 %s64, %s65
      %p67 = scmp.eq.s32.totalorder %s66, 0
      %s69 = sadd.s32 %s68, 1
      %s70 = scalar_select %p67, %s68, %s69
      %p73 = pneg %p67
      %p74 = scmp.eq.s32.totalorder %s16, 1
      %p75 = por %p73, %p74
      %p76 = scmp.ne.s32.totalorder %s68, %s71
      %p77 = scmp.eq.s32.totalorder %s16, 0
      %p78 = por %p76, %p77
      %p79 = scmp.ne.s32.totalorder %s68, %s71
      %p80 = scmp.eq.s32.totalorder %s21, 1
      %p81 = por %p79, %p80
      %p82 = scmp.ne.s32.totalorder %s71, %s72
      %p83 = scmp.eq.s32.totalorder %s21, 0
      %p84 = por %p82, %p83
      %p85 = scmp.ne.s32.totalorder %s71, %s72
      %p86 = scmp.eq.s32.totalorder %s22, 1
      %p87 = por %p85, %p86
      %p89 = scmp.ne.s32.totalorder %s72, %s88
      %p90 = scmp.eq.s32.totalorder %s22, 0
      %p91 = por %p89, %p90
      %s93 = sadd.s32 %s92, 1
      %p96 = scmp.eq.s32.totalorder %s16, 1
      %p97 = scmp.ne.s32.totalorder %s92, %s94
      %p98 = scmp.eq.s32.totalorder %s16, 0
      %p99 = por %p97, %p98
      %p100 = scmp.ne.s32.totalorder %s92, %s94
      %p101 = scmp.eq.s32.totalorder %s21, 1
      %p102 = por %p100, %p101
      %p103 = scmp.ne.s32.totalorder %s94, %s95
      %p104 = scmp.eq.s32.totalorder %s21, 0
      %p105 = por %p103, %p104
      %p106 = scmp.ne.s32.totalorder %s94, %s95
      %p107 = scmp.eq.s32.totalorder %s22, 1
      %p108 = por %p106, %p107
      %p110 = scmp.ne.s32.totalorder %s95, %s109
      %p111 = scmp.eq.s32.totalorder %s22, 0
      %p112 = por %p110, %p111
      %s114 = sadd.s32 %s113, 1
      %p117 = scmp.eq.s32.totalorder %s16, 1
      %p118 = scmp.ne.s32.totalorder %s113, %s115
      %p119 = scmp.eq.s32.totalorder %s16, 0
      %p120 = por %p118, %p119
      %p121 = scmp.ne.s32.totalorder %s113, %s115
      %p122 = scmp.eq.s32.totalorder %s21, 1
      %p123 = por %p121, %p122
      %p124 = scmp.ne.s32.totalorder %s115, %s116
      %p125 = scmp.eq.s32.totalorder %s21, 0
      %p126 = por %p124, %p125
      %p127 = scmp.ne.s32.totalorder %s115, %s116
      %p128 = scmp.eq.s32.totalorder %s22, 1
      %p129 = por %p127, %p128
      %p131 = scmp.ne.s32.totalorder %s116, %s130
      %p132 = scmp.eq.s32.totalorder %s22, 0
      %p133 = por %p131, %p132
      %s135 = sadd.s32 %s134, 1
      %p138 = scmp.eq.s32.totalorder %s16, 1
      %p139 = scmp.ne.s32.totalorder %s134, %s136
      %p140 = scmp.eq.s32.totalorder %s16, 0
      %p141 = por %p139, %p140
      %p142 = scmp.ne.s32.totalorder %s134, %s136
      %p143 = scmp.eq.s32.totalorder %s21, 1
      %p144 = por %p142, %p143
      %p145 = scmp.ne.s32.totalorder %s136, %s137
      %p146 = scmp.eq.s32.totalorder %s21, 0
      %p147 = por %p145, %p146
      %p148 = scmp.ne.s32.totalorder %s136, %s137
      %p149 = scmp.eq.s32.totalorder %s22, 1
      %p150 = por %p148, %p149
      %p152 = scmp.ne.s32.totalorder %s137, %s151
      %p153 = scmp.eq.s32.totalorder %s22, 0
      %p154 = por %p152, %p153
      %s156 = sadd.s32 %s155, 1
      %p159 = scmp.eq.s32.totalorder %s16, 1
      %p160 = scmp.ne.s32.totalorder %s155, %s157
      %p161 = scmp.eq.s32.totalorder %s16, 0
      %p162 = por %p160, %p161
      %p163 = scmp.ne.s32.totalorder %s155, %s157
      %p164 = scmp.eq.s32.totalorder %s21, 1
      %p165 = por %p163, %p164
      %p166 = scmp.ne.s32.totalorder %s157, %s158
      %p167 = scmp.eq.s32.totalorder %s21, 0
      %p168 = por %p166, %p167
      %p169 = scmp.ne.s32.totalorder %s157, %s158
      %p170 = scmp.eq.s32.totalorder %s22, 1
      %p171 = por %p169, %p170
      %p173 = scmp.ne.s32.totalorder %s158, %s172
      %p174 = scmp.eq.s32.totalorder %s22, 0
      %p175 = por %p173, %p174
      %s177 = sadd.s32 %s176, 1
      %p180 = scmp.eq.s32.totalorder %s16, 1
      %p181 = scmp.ne.s32.totalorder %s176, %s178
      %p182 = scmp.eq.s32.totalorder %s16, 0
      %p183 = por %p181, %p182
      %p184 = scmp.ne.s32.totalorder %s176, %s178
      %p185 = scmp.eq.s32.totalorder %s21, 1
      %p186 = por %p184, %p185
      %p187 = scmp.ne.s32.totalorder %s178, %s179
      %p188 = scmp.eq.s32.totalorder %s21, 0
      %p189 = por %p187, %p188
      %p190 = scmp.ne.s32.totalorder %s178, %s179
      %p191 = scmp.eq.s32.totalorder %s22, 1
      %p192 = por %p190, %p191
      %p194 = scmp.ne.s32.totalorder %s179, %s193
      %p195 = scmp.eq.s32.totalorder %s22, 0
      %p196 = por %p194, %p195
      %s197 = ssub.s32 %s23, %s35
      %s198 = ssub.s32 %s24, %s31
      %s199 = sor.u32 %s197, %s198
      %p200 = scmp.eq.s32.totalorder %s199, 0
      %s202 = sadd.s32 %s201, 1
      %s203 = scalar_select %p200, %s201, %s202
      %p206 = pneg %p200
      %p207 = scmp.eq.s32.totalorder %s16, 1
      %p208 = por %p206, %p207
      %p209 = scmp.ne.s32.totalorder %s201, %s204
      %p210 = scmp.eq.s32.totalorder %s16, 0
      %p211 = por %p209, %p210
      %p212 = scmp.ne.s32.totalorder %s201, %s204
      %p213 = scmp.eq.s32.totalorder %s21, 1
      %p214 = por %p212, %p213
      %p215 = scmp.ne.s32.totalorder %s204, %s205
      %p216 = scmp.eq.s32.totalorder %s21, 0
      %p217 = por %p215, %p216
      %p218 = scmp.ne.s32.totalorder %s204, %s205
      %p219 = scmp.eq.s32.totalorder %s22, 1
      %p220 = por %p218, %p219
      %p222 = scmp.ne.s32.totalorder %s205, %s221
      %p223 = scmp.eq.s32.totalorder %s22, 0
      %p224 = por %p222, %p223
      %p225 = scmp.le.s32.totalorder 1, %s16
      %p226 = scmp.lt.s32.totalorder %s16, 3
      %p227 = pnand %p225, %p226
      %p228 = pneg %p227
      // Predicated region
      $region9: #{tpu_custom_call.1} parent=5 // pred_check
        _
      $region10: #{tpu_custom_call.1} parent=5 // pred_check_branch
        %230 = sbr.rel (%p227) target = $region12
      $region11: #{tpu_custom_call.1} parent=5 // pred_region
        %s231 = ssub.s32 %s16, 1
        // Predicated region
        $region13: #{tpu_custom_call.1} parent=11 // pred_check
          %p232 = pneg %p105
        $region14: #{tpu_custom_call.1} parent=11 // pred_check_branch
          %234 = sbr.rel (%p232) target = $region16
        $region15: #{tpu_custom_call.1} parent=11 // pred_region
          _
        $region16: #{tpu_custom_call.1} parent=11 // pred_fallthru
          _
        // Predicated region
        $region17: #{tpu_custom_call.1} parent=11 // pred_check
          %p235 = pneg %p126
        $region18: #{tpu_custom_call.1} parent=11 // pred_check_branch
          %237 = sbr.rel (%p235) target = $region20
        $region19: #{tpu_custom_call.1} parent=11 // pred_region
          _
        $region20: #{tpu_custom_call.1} parent=11 // pred_fallthru
          _
        // Predicated region
        $region21: #{tpu_custom_call.1} parent=11 // pred_check
          %p238 = pneg %p147
        $region22: #{tpu_custom_call.1} parent=11 // pred_check_branch
          %240 = sbr.rel (%p238) target = $region24
        $region23: #{tpu_custom_call.1} parent=11 // pred_region
          _
        $region24: #{tpu_custom_call.1} parent=11 // pred_fallthru
          _
        // Predicated region
        $region25: #{tpu_custom_call.1} parent=11 // pred_check
          %p241 = pneg %p168
        $region26: #{tpu_custom_call.1} parent=11 // pred_check_branch
          %243 = sbr.rel (%p241) target = $region28
        $region27: #{tpu_custom_call.1} parent=11 // pred_region
          _
        $region28: #{tpu_custom_call.1} parent=11 // pred_fallthru
          _
        // Predicated region
        $region29: #{tpu_custom_call.1} parent=11 // pred_check
          %p244 = pneg %p189
        $region30: #{tpu_custom_call.1} parent=11 // pred_check_branch
          %246 = sbr.rel (%p244) target = $region32
        $region31: #{tpu_custom_call.1} parent=11 // pred_region
          _
        $region32: #{tpu_custom_call.1} parent=11 // pred_fallthru
          _
      $region12: #{tpu_custom_call.1} parent=5 // pred_fallthru
        _
      %p247 = scmp.lt.s32.totalorder %s16, 2
      // Predicated region
      $region33: #{tpu_custom_call.1} parent=5 // pred_check
        %p248 = pneg %p247
      $region34: #{tpu_custom_call.1} parent=5 // pred_check_branch
        %250 = sbr.rel (%p248) target = $region36
      $region35: #{tpu_custom_call.1} parent=5 // pred_region
        // Predicated region
        $region37: #{tpu_custom_call.1} parent=35 // pred_check
          %p251 = pneg %p50
        $region38: #{tpu_custom_call.1} parent=35 // pred_check_branch
          %253 = sbr.rel (%p251) target = $region40
        $region39: #{tpu_custom_call.1} parent=35 // pred_region
          %s254 = smul.u32 2, %s24
          %p255 = scmp.lt.s32.totalorder %s23, 1
          %s256 = scalar_select %p255, %s23, 1
          %p257 = scmp.lt.s32.totalorder %s254, 1
          %s258 = scalar_select %p257, %s254, 1
          %s259 = smul.addr %s256, 4
          %s260 = sadd.s32 %s258, %s259
          %s261 = smul.addr %s260, 8
          %s262 = scalar_lea.vmem %s0, %s261
          %s263 = smul.u32 2, %s24
        $region40: #{tpu_custom_call.1} parent=35 // pred_fallthru
          _
        // Predicated region
        $region41: #{tpu_custom_call.1} parent=35 // pred_check
          %p264 = pneg %p78
        $region42: #{tpu_custom_call.1} parent=35 // pred_check_branch
          %266 = sbr.rel (%p264) target = $region44
        $region43: #{tpu_custom_call.1} parent=35 // pred_region
          %s267 = smul.u32 2, %s24
          %p268 = scmp.lt.s32.totalorder %s23, 1
          %s269 = scalar_select %p268, %s23, 1
          %p270 = scmp.lt.s32.totalorder %s267, 1
          %s271 = scalar_select %p270, %s267, 1
          %s272 = smul.addr %s269, 4
          %s273 = sadd.s32 %s271, %s272
          %s274 = smul.addr %s273, 8
          %s275 = scalar_lea.vmem %s1, %s274
          %s276 = smul.u32 2, %s24
        $region44: #{tpu_custom_call.1} parent=35 // pred_fallthru
          _
      $region36: #{tpu_custom_call.1} parent=5 // pred_fallthru
        _
      %p277 = scmp.le.s32.totalorder 1, %s16
      %p278 = scmp.lt.s32.totalorder %s16, 3
      %p279 = pnand %p277, %p278
      %p280 = pneg %p279
      // Predicated region
      $region45: #{tpu_custom_call.1} parent=5 // pred_check
        _
      $region46: #{tpu_custom_call.1} parent=5 // pred_check_branch
        %282 = sbr.rel (%p279) target = $region48
      $region47: #{tpu_custom_call.1} parent=5 // pred_region
        %s283 = ssub.s32 %s16, 1
        %s284 = smul.u32 2, %s26
        %p285 = scmp.lt.s32.totalorder %s25, 1
        %s286 = scalar_select %p285, %s25, 1
        %p287 = scmp.lt.s32.totalorder %s284, 1
        %s288 = scalar_select %p287, %s284, 1
        %s289 = smul.addr %s286, 4
        %s290 = sadd.s32 %s288, %s289
        %s291 = smul.addr %s290, 8
        %s292 = scalar_lea.vmem %s0, %s291
        %p293 = pneg %p56
        %p294 = pneg %p53
        %s295 = smul.u32 2, %s26
        %p296 = scmp.lt.s32.totalorder %s25, 1
        %s297 = scalar_select %p296, %s25, 1
        %p298 = scmp.lt.s32.totalorder %s295, 1
        %s299 = scalar_select %p298, %s295, 1
        %s300 = smul.addr %s297, 4
        %s301 = sadd.s32 %s299, %s300
        %s302 = smul.addr %s301, 8
        %s303 = scalar_lea.vmem %s1, %s302
        %p304 = pneg %p84
        %p305 = pneg %p81
        %p306 = pneg %p105
        %p307 = pneg %p102
        %p308 = pneg %p126
        %p309 = pneg %p123
        %p310 = pneg %p147
        %p311 = pneg %p144
        %p312 = pneg %p168
        %p313 = pneg %p165
        %p314 = pneg %p189
        %p315 = pneg %p186
        %p316 = pneg %p217
        %p317 = pneg %p214
        %s318 = sand.u32 %s204, 1
        %s319 = scalar_lea.sflag [#allocation3], %s318
        %s320 = sand.u32 %s204, 1
        %s321 = smul.addr %s320, 4
        %s322 = scalar_lea.vmem [#allocation2], %s321
        %s323 = smul.u32 2, %s26
        %p324 = scmp.lt.s32.totalorder %s25, 1
        %s325 = scalar_select %p324, %s25, 1
        %p326 = scmp.lt.s32.totalorder %s323, 1
        %s327 = scalar_select %p326, %s323, 1
        %s328 = smul.addr %s325, 4
        %s329 = sadd.s32 %s327, %s328
        %s330 = smul.addr %s329, 8
        %s331 = scalar_lea.vmem %s0, %s330
        %s332 = smul.u32 2, %s26
        %s333 = smul.u32 2, %s26
        %p334 = scmp.lt.s32.totalorder %s25, 1
        %s335 = scalar_select %p334, %s25, 1
        %p336 = scmp.lt.s32.totalorder %s333, 1
        %s337 = scalar_select %p336, %s333, 1
        %s338 = smul.addr %s335, 4
        %s339 = sadd.s32 %s337, %s338
        %s340 = smul.addr %s339, 8
        %s341 = scalar_lea.vmem %s1, %s340
        %s342 = smul.u32 2, %s26
        %s343 = smul.u32 2, %s26
        %v344 = vld [vmem:[%s2] sm:$0xff]
        %v345 = vld [vmem:[%s2 + $0x8] sm:$0xff]
        %v346 = vld [vmem:[%s2 + $0x10] sm:$0xff]
        %v347 = vld [vmem:[%s2 + $0x18] sm:$0xff]
        %v348 = vld [vmem:[%s331] sm:$0xff]
        %v349 = vld [vmem:[%s331 + $0x8] sm:$0xff]
        %v350 = vld [vmem:[%s331 + $0x10] sm:$0xff]
        %v351 = vld [vmem:[%s331 + $0x18] sm:$0xff]
        %v352 = vld [vmem:[%s3] sm:$0xff]
        %v353 = vld [vmem:[%s3 + $0x8] sm:$0xff]
        %v354 = vld [vmem:[%s3 + $0x10] sm:$0xff]
        %v355 = vld [vmem:[%s3 + $0x18] sm:$0xff]
        %v356 = vld [vmem:[%s341] sm:$0xff]
        %v357 = vld [vmem:[%s341 + $0x8] sm:$0xff]
        %v358 = vld [vmem:[%s341 + $0x10] sm:$0xff]
        %v359 = vld [vmem:[%s341 + $0x18] sm:$0xff]
        %vm360 = vcmask 130048
        %v362 = vsel %vm360, %v352, 0
        %v365 = vsel %vm360, %v353, 0
        %v368 = vsel %vm360, %v354, 0
        %v371 = vsel %vm360, %v355, 0
        %373 = vmatprep.subr.mxu0 %v357
        %374 = vmatpush1.msra.mxu0 %v356
        %375 = vmatprep.subr.mxu0 %v359
        %376 = vmatpush1.msra.mxu0 %v358
        %377 = vmatprep.subr.mxu0 0.0
        %378 = vmatpush1.msra.mxu0 0.0
        %379 = vmatprep.subr.mxu0 0.0
        %380 = vmatpush1.msra.mxu0 0.0
        %381 = vmatprep.subr.mxu0 0.0
        %382 = vmatpush1.msra.mxu0 0.0
        %383 = vmatprep.subr.mxu0 0.0
        %384 = vmatpush1.msra.mxu0 0.0
        %385 = vmatprep.subr.mxu0 0.0
        %386 = vmatpush1.msra.mxu0 0.0
        %387 = vmatprep.subr.mxu0 0.0
        %388 = vmatpush1.msra.mxu0 0.0
        %389 = vmatprep.subr.mxu0 0.0
        %390 = vmatpush1.msra.mxu0 0.0
        %391 = vmatprep.subr.mxu0 0.0
        %392 = vmatpush1.msra.mxu0 0.0
        %393 = vmatprep.subr.mxu0 0.0
        %394 = vmatpush1.msra.mxu0 0.0
        %395 = vmatprep.subr.mxu0 0.0
        %396 = vmatpush1.msra.mxu0 0.0
        %397 = vmatprep.subr.mxu0 0.0
        %398 = vmatpush1.msra.mxu0 0.0
        %399 = vmatprep.subr.mxu0 0.0
        %400 = vmatpush1.msra.mxu0 0.0
        %401 = vmatprep.subr.mxu0 0.0
        %402 = vmatpush1.msra.mxu0 0.0
        %403 = vmatprep.subr.mxu0 0.0
        %404 = vmatpush1.msra.mxu0 0.0
        %405 = vmatprep.subr.mxu0 0.0
        %406 = vmatpush1.msra.mxu0 0.0
        %407 = vmatprep.subr.mxu0 0.0
        %408 = vmatpush1.msra.mxu0 0.0
        %409 = vmatprep.subr.mxu0 0.0
        %410 = vmatpush1.msra.mxu0 0.0
        %411 = vmatprep.subr.mxu0 0.0
        %412 = vmatpush1.msra.mxu0 0.0
        %413 = vmatprep.subr.mxu0 0.0
        %414 = vmatpush1.msra.mxu0 0.0
        %415 = vmatprep.subr.mxu0 0.0
        %416 = vmatpush1.msra.mxu0 0.0
        %417 = vmatprep.subr.mxu0 0.0
        %418 = vmatpush1.msra.mxu0 0.0
        %419 = vmatprep.subr.mxu0 0.0
        %420 = vmatpush1.msra.mxu0 0.0
        %421 = vmatprep.subr.mxu0 0.0
        %422 = vmatpush1.msra.mxu0 0.0
        %423 = vmatprep.subr.mxu0 0.0
        %424 = vmatpush1.msra.mxu0 0.0
        %425 = vmatprep.subr.mxu0 0.0
        %426 = vmatpush1.msra.mxu0 0.0
        %427 = vmatprep.subr.mxu0 0.0
        %428 = vmatpush1.msra.mxu0 0.0
        %429 = vmatprep.subr.mxu0 0.0
        %430 = vmatpush1.msra.mxu0 0.0
        %431 = vmatprep.subr.mxu0 0.0
        %432 = vmatpush1.msra.mxu0 0.0
        %433 = vmatprep.subr.mxu0 0.0
        %434 = vmatpush1.msra.mxu0 0.0
        %435 = vmatprep.subr.mxu0 0.0
        %436 = vmatpush1.msra.mxu0 0.0
        %437 = vmatprep.mubr.f32.mxu0 0.0
        %438 = vmatmul.mubr.f32.gmra.mrb[0].mxu0 %v362
        %v439 = vpop.f32.mrb[0].mxu0
        %v440 = vadd.f32 0.0, %v439
        %v441 = vpop.f32.mrb[0].mxu0
        %v442 = vadd.f32 0.0, %v441
        %443 = vmatprep.mubr.f32.mxu0 0.0
        %444 = vmatmul.mubr.f32.gmra.mrb[0].mxu0 %v365
        %v445 = vpop.f32.mrb[0].mxu0
        %v446 = vadd.f32 0.0, %v445
        %v447 = vpop.f32.mrb[0].mxu0
        %v448 = vadd.f32 0.0, %v447
        %449 = vmatprep.mubr.f32.mxu0 0.0
        %450 = vmatmul.mubr.f32.gmra.mrb[0].mxu0 %v368
        %v451 = vpop.f32.mrb[0].mxu0
        %v452 = vadd.f32 0.0, %v451
        %v453 = vpop.f32.mrb[0].mxu0
        %v454 = vadd.f32 0.0, %v453
        %455 = vmatprep.mubr.f32.mxu0 0.0
        %456 = vmatmul.mubr.f32.gmra.mrb[0].mxu0 %v371
        %v457 = vpop.f32.mrb[0].mxu0
        %v458 = vadd.f32 0.0, %v457
        %v459 = vpop.f32.mrb[0].mxu0
        %v460 = vadd.f32 0.0, %v459
        %461 = vdwg.mxu0
        %v463 = vsel %vm360, %v344, 0
        %v466 = vsel %vm360, %v345, 0
        %v469 = vsel %vm360, %v346, 0
        %v472 = vsel %vm360, %v347, 0
        %474 = vmatprep.subr.mxu0 %v349
        %475 = vmatpush1.msra.mxu0 %v348
        %476 = vmatprep.subr.mxu0 %v351
        %477 = vmatpush1.msra.mxu0 %v350
        %478 = vmatprep.subr.mxu0 0.0
        %479 = vmatpush1.msra.mxu0 0.0
        %480 = vmatprep.subr.mxu0 0.0
        %481 = vmatpush1.msra.mxu0 0.0
        %482 = vmatprep.subr.mxu0 0.0
        %483 = vmatpush1.msra.mxu0 0.0
        %484 = vmatprep.subr.mxu0 0.0
        %485 = vmatpush1.msra.mxu0 0.0
        %486 = vmatprep.subr.mxu0 0.0
        %487 = vmatpush1.msra.mxu0 0.0
        %488 = vmatprep.subr.mxu0 0.0
        %489 = vmatpush1.msra.mxu0 0.0
        %490 = vmatprep.subr.mxu0 0.0
        %491 = vmatpush1.msra.mxu0 0.0
        %492 = vmatprep.subr.mxu0 0.0
        %493 = vmatpush1.msra.mxu0 0.0
        %494 = vmatprep.subr.mxu0 0.0
        %495 = vmatpush1.msra.mxu0 0.0
        %496 = vmatprep.subr.mxu0 0.0
        %497 = vmatpush1.msra.mxu0 0.0
        %498 = vmatprep.subr.mxu0 0.0
        %499 = vmatpush1.msra.mxu0 0.0
        %500 = vmatprep.subr.mxu0 0.0
        %501 = vmatpush1.msra.mxu0 0.0
        %502 = vmatprep.subr.mxu0 0.0
        %503 = vmatpush1.msra.mxu0 0.0
        %504 = vmatprep.subr.mxu0 0.0
        %505 = vmatpush1.msra.mxu0 0.0
        %506 = vmatprep.subr.mxu0 0.0
        %507 = vmatpush1.msra.mxu0 0.0
        %508 = vmatprep.subr.mxu0 0.0
        %509 = vmatpush1.msra.mxu0 0.0
        %510 = vmatprep.subr.mxu0 0.0
        %511 = vmatpush1.msra.mxu0 0.0
        %512 = vmatprep.subr.mxu0 0.0
        %513 = vmatpush1.msra.mxu0 0.0
        %514 = vmatprep.subr.mxu0 0.0
        %515 = vmatpush1.msra.mxu0 0.0
        %516 = vmatprep.subr.mxu0 0.0
        %517 = vmatpush1.msra.mxu0 0.0
        %518 = vmatprep.subr.mxu0 0.0
        %519 = vmatpush1.msra.mxu0 0.0
        %520 = vmatprep.subr.mxu0 0.0
        %521 = vmatpush1.msra.mxu0 0.0
        %522 = vmatprep.subr.mxu0 0.0
        %523 = vmatpush1.msra.mxu0 0.0
        %524 = vmatprep.subr.mxu0 0.0
        %525 = vmatpush1.msra.mxu0 0.0
        %526 = vmatprep.subr.mxu0 0.0
        %527 = vmatpush1.msra.mxu0 0.0
        %528 = vmatprep.subr.mxu0 0.0
        %529 = vmatpush1.msra.mxu0 0.0
        %530 = vmatprep.subr.mxu0 0.0
        %531 = vmatpush1.msra.mxu0 0.0
        %532 = vmatprep.subr.mxu0 0.0
        %533 = vmatpush1.msra.mxu0 0.0
        %534 = vmatprep.subr.mxu0 0.0
        %535 = vmatpush1.msra.mxu0 0.0
        %536 = vmatprep.subr.mxu0 0.0
        %537 = vmatpush1.msra.mxu0 0.0
        %538 = vmatprep.mubr.f32.mxu0 0.0
        %539 = vmatmul.mubr.f32.gmra.mrb[0].mxu0 %v463
        %v540 = vpop.f32.mrb[0].mxu0
        %v541 = vadd.f32 %v440, %v540
        %v542 = vpop.f32.mrb[0].mxu0
        %v543 = vadd.f32 %v442, %v542
        %544 = vmatprep.mubr.f32.mxu0 0.0
        %545 = vmatmul.mubr.f32.gmra.mrb[0].mxu0 %v466
        %v546 = vpop.f32.mrb[0].mxu0
        %v547 = vadd.f32 %v446, %v546
        %v548 = vpop.f32.mrb[0].mxu0
        %v549 = vadd.f32 %v448, %v548
        %550 = vmatprep.mubr.f32.mxu0 0.0
        %551 = vmatmul.mubr.f32.gmra.mrb[0].mxu0 %v469
        %v552 = vpop.f32.mrb[0].mxu0
        %v553 = vadd.f32 %v452, %v552
        %v554 = vpop.f32.mrb[0].mxu0
        %v555 = vadd.f32 %v454, %v554
        %556 = vmatprep.mubr.f32.mxu0 0.0
        %557 = vmatmul.mubr.f32.gmra.mrb[0].mxu0 %v472
        %v558 = vpop.f32.mrb[0].mxu0
        %v559 = vadd.f32 %v458, %v558
        %v560 = vpop.f32.mrb[0].mxu0
        %v561 = vadd.f32 %v460, %v560
        %562 = vdwg.mxu0
        %v563 = vld [vmem:[%s4] sm:$0xff]
        %v564 = vld [vmem:[%s4 + $0x8] sm:$0xff]
        %v565 = vld [vmem:[%s4 + $0x10] sm:$0xff]
        %v566 = vld [vmem:[%s4 + $0x18] sm:$0xff]
        %568 = vset.pattern.permute.xlu0 0
        %569 = vperm.xlu0 %568, %v563
        %v570 = vpop.permute.xlu0 %569
        %573 = vset.pattern.permute.xlu0 0
        %574 = vperm.xlu0 %573, %v564
        %v575 = vpop.permute.xlu0 %574
        %578 = vset.pattern.permute.xlu0 0
        %579 = vperm.xlu0 %578, %v565
        %v580 = vpop.permute.xlu0 %579
        %583 = vset.pattern.permute.xlu0 0
        %584 = vperm.xlu0 %583, %v566
        %v585 = vpop.permute.xlu0 %584
        %v587 = vadd.f32 %v541, %v570
        %v588 = vadd.f32 %v543, %v570
        %v589 = vadd.f32 %v547, %v575
        %v590 = vadd.f32 %v549, %v575
        %v591 = vadd.f32 %v553, %v580
        %v592 = vadd.f32 %v555, %v580
        %v593 = vadd.f32 %v559, %v585
        %v594 = vadd.f32 %v561, %v585
        %v595 = vmax.f32 %v587, 0.0
        %v596 = vmax.f32 %v588, 0.0
        %v597 = vmax.f32 %v589, 0.0
        %v598 = vmax.f32 %v590, 0.0
        %v599 = vmax.f32 %v591, 0.0
        %v600 = vmax.f32 %v592, 0.0
        %v601 = vmax.f32 %v593, 0.0
        %v602 = vmax.f32 %v594, 0.0
        %v603 = vld [vmem:[%s5] sm:$0x3]
        %v604 = vld [vmem:[%s6] sm:$0x3]
        %606 = vset.pattern.permute.xlu0 0
        %607 = vperm.xlu0 %606, %v604
        %v608 = vpop.permute.xlu0 %607
        %vm610 = vcmask 261120
        %v612 = vsel %vm610, %v603, 0
        %614 = vmatprep.subr.mxu0 %v596
        %615 = vmatpush1.msra.mxu0 %v595
        %616 = vmatprep.subr.mxu0 %v598
        %617 = vmatpush1.msra.mxu0 %v597
        %618 = vmatprep.subr.mxu0 %v600
        %619 = vmatpush1.msra.mxu0 %v599
        %620 = vmatprep.subr.mxu0 %v602
        %621 = vmatpush1.msra.mxu0 %v601
        %622 = vmatprep.subr.mxu0 0.0
        %623 = vmatpush1.msra.mxu0 0.0
        %624 = vmatprep.subr.mxu0 0.0
        %625 = vmatpush1.msra.mxu0 0.0
        %626 = vmatprep.subr.mxu0 0.0
        %627 = vmatpush1.msra.mxu0 0.0
        %628 = vmatprep.subr.mxu0 0.0
        %629 = vmatpush1.msra.mxu0 0.0
        %630 = vmatprep.subr.mxu0 0.0
        %631 = vmatpush1.msra.mxu0 0.0
        %632 = vmatprep.subr.mxu0 0.0
        %633 = vmatpush1.msra.mxu0 0.0
        %634 = vmatprep.subr.mxu0 0.0
        %635 = vmatpush1.msra.mxu0 0.0
        %636 = vmatprep.subr.mxu0 0.0
        %637 = vmatpush1.msra.mxu0 0.0
        %638 = vmatprep.subr.mxu0 0.0
        %639 = vmatpush1.msra.mxu0 0.0
        %640 = vmatprep.subr.mxu0 0.0
        %641 = vmatpush1.msra.mxu0 0.0
        %642 = vmatprep.subr.mxu0 0.0
        %643 = vmatpush1.msra.mxu0 0.0
        %644 = vmatprep.subr.mxu0 0.0
        %645 = vmatpush1.msra.mxu0 0.0
        %646 = vmatprep.subr.mxu0 0.0
        %647 = vmatpush1.msra.mxu0 0.0
        %648 = vmatprep.subr.mxu0 0.0
        %649 = vmatpush1.msra.mxu0 0.0
        %650 = vmatprep.subr.mxu0 0.0
        %651 = vmatpush1.msra.mxu0 0.0
        %652 = vmatprep.subr.mxu0 0.0
        %653 = vmatpush1.msra.mxu0 0.0
        %654 = vmatprep.subr.mxu0 0.0
        %655 = vmatpush1.msra.mxu0 0.0
        %656 = vmatprep.subr.mxu0 0.0
        %657 = vmatpush1.msra.mxu0 0.0
        %658 = vmatprep.subr.mxu0 0.0
        %659 = vmatpush1.msra.mxu0 0.0
        %660 = vmatprep.subr.mxu0 0.0
        %661 = vmatpush1.msra.mxu0 0.0
        %662 = vmatprep.subr.mxu0 0.0
        %663 = vmatpush1.msra.mxu0 0.0
        %664 = vmatprep.subr.mxu0 0.0
        %665 = vmatpush1.msra.mxu0 0.0
        %666 = vmatprep.subr.mxu0 0.0
        %667 = vmatpush1.msra.mxu0 0.0
        %668 = vmatprep.subr.mxu0 0.0
        %669 = vmatpush1.msra.mxu0 0.0
        %670 = vmatprep.subr.mxu0 0.0
        %671 = vmatpush1.msra.mxu0 0.0
        %672 = vmatprep.subr.mxu0 0.0
        %673 = vmatpush1.msra.mxu0 0.0
        %674 = vmatprep.subr.mxu0 0.0
        %675 = vmatpush1.msra.mxu0 0.0
        %676 = vmatprep.subr.mxu0 0.0
        %677 = vmatpush1.msra.mxu0 0.0
        %678 = vmatprep.mubr.f32.mxu0 0.0
        %679 = vmatmul.mubr.f32.gmra.mrb[0].mxu0 %v612
        %v680 = vpop.f32.mrb[0].mxu0
        %v681 = vadd.f32 %v608, %v680
        %v682 = vpop.f32.mrb[0].mxu0
        %v683 = vadd.f32 %v608, %v682
        %684 = vdwg.mxu0
        %v685 = vmax.f32 %v681, 0.0
        %v686 = vmax.f32 %v683, 0.0
        %v689 = vcombine.low %v685, %v686
        %v691 = vunpack.c.l.s4 1983009808
        %v692 = vunpack.c.0.s8 %v691
        %v693 = vlaneseq
        %v694 = vshrl.u32 %v693, 7
        %v695 = vsub.s32 %v692, %v694
        %v696 = vrot.slane %v689, %v695
        %698 = vst [vmem:[%s322] sm:$0xf] %v696
        %s699 = sand.u32 %s204, 1
        %s700 = scalar_lea.sflag [#allocation3], %s699
        %s701 = sand.u32 %s204, 1
        %s702 = smul.addr %s701, 4
        %s703 = scalar_lea.vmem [#allocation2], %s702
        // Predicated region
        $region49: #{tpu_custom_call.1} parent=47 // pred_check
          %p704 = pneg %p214
        $region50: #{tpu_custom_call.1} parent=47 // pred_check_branch
          %706 = sbr.rel (%p704) target = $region52
        $region51: #{tpu_custom_call.1} parent=47 // pred_region
          %s707 = smul.u32 2, %s26
          %s709 = ssub.s32 64, 64
          %710 = vsyncadd %s700, %s709
          %s711 = smul.addr %s25, 2
          %s712 = sadd.s32 %s707, %s711
          %s713 = smul.addr %s712, 32
          %s714 = scalar_lea.hbm %s7, %s713
          %s716 = sshll.u32 %s703, 4
          %s717 = int_to_ptr.vmem [resolvable:$true] %s716
          %719 = dma.vmem_to_hbm [thread:$0]  %s717, 64, %s714, %s700
        $region52: #{tpu_custom_call.1} parent=47 // pred_fallthru
          _
      $region48: #{tpu_custom_call.1} parent=5 // pred_fallthru
        _
      %p720 = scmp.le.s32.totalorder 2, %s16
      // Predicated region
      $region53: #{tpu_custom_call.1} parent=5 // pred_check
        %p721 = pneg %p720
      $region54: #{tpu_custom_call.1} parent=5 // pred_check_branch
        %723 = sbr.rel (%p721) target = $region56
      $region55: #{tpu_custom_call.1} parent=5 // pred_region
        %s724 = ssub.s32 %s16, 2
        // Predicated region
        $region57: #{tpu_custom_call.1} parent=55 // pred_check
          %p725 = pneg %p220
        $region58: #{tpu_custom_call.1} parent=55 // pred_check_branch
          %727 = sbr.rel (%p725) target = $region60
        $region59: #{tpu_custom_call.1} parent=55 // pred_region
          %s728 = sand.u32 %s205, 1
          %s729 = scalar_lea.sflag [#allocation3], %s728
          %s730 = sand.u32 %s205, 1
          %s731 = smul.addr %s730, 4
          %s732 = scalar_lea.vmem [#allocation2], %s731
          %733 = dma.done %s729, 64
        $region60: #{tpu_custom_call.1} parent=55 // pred_fallthru
          _
      $region56: #{tpu_custom_call.1} parent=5 // pred_fallthru
        _
    $region6: #{tpu_custom_call.1} parent=1 // loop_footer
      %s20 = sadd.s32 1, %s16
    $region7: #{tpu_custom_call.1} parent=1 // loop_footer_branch
      %15 = sbr.rel target = $region3
    $region8: #{tpu_custom_call.1} parent=1 // loop_exit
      _
    %734 = vsyncpa [#allocation3], 1
    %s735 = scalar_lea.sflag [#allocation3], 1
    %736 = vsyncpa %s735, 1

</llo_original>
